<compile_context>
chip_gen: v5e
topology: v5e:2x2
jax: 0.10.0
libtpu: 0.0.40
codegen_flags: <defaults>
</compile_context>

<pallas_src>
import jax
import jax.numpy as jnp
from jax.experimental import pallas as pl
from jax.experimental.pallas import tpu as pltpu

NUM_HIDDEN = 8


def qsa_kernel(x_ref, a_ref, slab_ref, out_ref):
    # x_ref:    (F, bb)        observations, batch on the lane axis
    # a_ref:    (1, bb)  i32   action index per batch lane
    # slab_ref: (H, F+A+3) f32 packed params, columns:
    #             [0:F)   = W1_x^T,  [F:F+A) = W1_a^T,
    #             F+A     = b1,      F+A+1   = W2,   F+A+2 = [b2, 0, ...]^T
    # out_ref:  (1, bb)  f32   q-values (lane-dense store)
    F, bb = x_ref.shape
    H, cols = slab_ref.shape
    A = cols - F - 3

    b1_col = slab_ref[:, F + A : F + A + 1]        # (H, 1)
    w2_col = slab_ref[:, F + A + 1 : F + A + 2]    # (H, 1)
    b2 = slab_ref[0:1, F + A + 2 : F + A + 3]      # (1, 1)

    # --- First linear layer on the VPU ------------------------------------
    # acc[h, b] = b1[h] + sum_f W1_x[f, h] * x[f, b] + W1_a[a[b], h]
    acc = jnp.broadcast_to(b1_col, (H, bb))        # init = bias splat, no zeros+add

    # Observation part: F (static, tiny) rank-1 multiply-accumulate steps.
    for f in range(F):
        acc = acc + slab_ref[:, f : f + 1] * x_ref[f : f + 1, :].astype(jnp.float32)

    # Action part: one-hot folded into A lane-wise compare-selects against
    # the lane-resident action row (pure VPU, no gather, no lane broadcast
    # of the mask).
    a_row = a_ref[...]                             # (1, bb) i32
    for k in range(A):
        onek = (a_row == k).astype(jnp.float32)    # (1, bb)
        acc = acc + slab_ref[:, F + k : F + k + 1] * onek

    hid = jnp.tanh(acc)                            # (H, bb), tanh on the EUP

    # --- Second linear layer: sublane reduce over H (XLU) ------------------
    q = jnp.sum(hid * w2_col, axis=0, keepdims=True) + b2   # (1, bb)
    out_ref[...] = q


def qsa_forward(x, a, slab, *, block_b=None):
    """x: (B, F) float, a: (B,) int actions, slab: packed params (H, F+A+3).

    Returns q-values of shape (B, 1), matching the PyTorch module's output.
    """
    B, F = x.shape
    H, cols = slab.shape

    if block_b is None:
        # Large blocks amortize the ~0.35 us per-grid-step overhead; keep a
        # multi-step grid only for big batches (v7x shards it over 2 TCs).
        block_b = B if B <= 4096 else 4096
    n_blocks = -(-B // block_b)          # ceil
    Bp = n_blocks * block_b

    # Batch-on-lanes layout (layout plumbing only, no compute hoisted here).
    xt = jnp.asarray(x).T                              # (F, B)
    at = jnp.asarray(a, jnp.int32).reshape(1, B)       # (1, B)
    if Bp != B:
        xt = jnp.pad(xt, ((0, 0), (0, Bp - B)))
        at = jnp.pad(at, ((0, 0), (0, Bp - B)))        # padded actions = 0 (valid)

    out = pl.pallas_call(
        qsa_kernel,
        out_shape=jax.ShapeDtypeStruct((1, Bp), jnp.float32),
        grid=(n_blocks,),
        in_specs=[
            pl.BlockSpec((F, block_b), lambda i: (0, i)),
            pl.BlockSpec((1, block_b), lambda i: (0, i)),
            pl.BlockSpec((H, cols), lambda i: (0, 0)),   # constant -> single DMA
        ],
        out_specs=pl.BlockSpec((1, block_b), lambda i: (0, i)),
        compiler_params=pltpu.CompilerParams(
            dimension_semantics=("parallel",),  # v7x: shard batch over 2 TCs
        ),
    )(xt, at, slab)

    return out[0, :B].reshape(B, 1)


def init_params(key, num_obs_features, num_actions, num_hidden=NUM_HIDDEN):
    """Deterministic init mimicking nn.Linear's uniform(-1/sqrt(fan_in), ...)."""
    fin1 = num_obs_features + num_actions
    k1, k2, k3, k4 = jax.random.split(key, 4)

    bound1 = 1.0 / jnp.sqrt(jnp.float32(fin1))
    w1 = jax.random.uniform(
        k1, (fin1, num_hidden), jnp.float32, minval=-bound1, maxval=bound1
    )
    b1 = jax.random.uniform(
        k2, (1, num_hidden), jnp.float32, minval=-bound1, maxval=bound1
    )

    bound2 = 1.0 / jnp.sqrt(jnp.float32(num_hidden))
    w2 = jax.random.uniform(
        k3, (num_hidden, 1), jnp.float32, minval=-bound2, maxval=bound2
    )
    b2 = jax.random.uniform(k4, (1, 1), jnp.float32, minval=-bound2, maxval=bound2)

    w1x = w1[:num_obs_features, :]  # (F, H)
    w1a = w1[num_obs_features:, :]  # (A, H)
    return (w1x, w1a, b1, w2, b2)


def pack_params(params, num_hidden=NUM_HIDDEN):
    """Pack all parameters into one transposed (H, F+A+3) slab -> single DMA."""
    w1x, w1a, b1, w2, b2 = params
    b2_col = jnp.zeros((num_hidden, 1), jnp.float32).at[0, 0].set(b2[0, 0])
    return jnp.concatenate(
        [w1x.T, w1a.T, b1.T, w2, b2_col], axis=1
    ).astype(jnp.float32)  # (H, F+A+3)


def qsa_reference(x, a, params, num_actions):
    """Pure-JAX reference matching the PyTorch forward (vectorized over B)."""
    w1x, w1a, b1, w2, b2 = params
    a_hot = jax.nn.one_hot(jnp.asarray(a), num_actions, dtype=jnp.float32)  # (B, A)
    z = jnp.concatenate([jnp.asarray(x, jnp.float32), a_hot], axis=1)       # (B, F+A)
    w1 = jnp.concatenate([w1x, w1a], axis=0)                                # (F+A, H)
    h = jnp.tanh(z @ w1 + b1)
    return h @ w2 + b2


if __name__ == "__main__":
    num_obs_features = 4
    num_actions = 3

    key = jax.random.PRNGKey(0)
    k_params, k_x, k_a = jax.random.split(key, 3)

    params = init_params(k_params, num_obs_features, num_actions)
    slab = pack_params(params)

    # Batched evaluation: 2 grid steps of 128 lanes each (lane-dense blocks,
    # exercises the parallel grid sharding on v7x).
    B = 256
    x = jax.random.normal(k_x, (B, num_obs_features), dtype=jnp.float32)
    a = jax.random.randint(k_a, (B,), 0, num_actions, dtype=jnp.int32)

    out = jax.block_until_ready(qsa_forward(x, a, slab, block_b=128))
    ref = qsa_reference(x, a, params, num_actions)
    assert out.shape == (B, 1)
    assert jnp.allclose(out, ref, atol=1e-5, rtol=1e-5), (out, ref)

    # Single-sample call, exactly the PyTorch module's forward(x, a) signature.
    out1 = jax.block_until_ready(qsa_forward(x[:1], a[:1], slab))
    ref1 = qsa_reference(x[:1], a[:1], params, num_actions)
    assert out1.shape == (1, 1)
    assert jnp.allclose(out1, ref1, atol=1e-5, rtol=1e-5), (out1, ref1)

    print("KERNEL_OK")
</pallas_src>

<mosaic_0001>
module attributes {stable_mosaic.version = 11 : i64} {
  func.func @qsa_kernel(%arg0: i32, %arg1: memref<4x128xf32, #tpu.memory_space<vmem>>, %arg2: memref<1x128xi32, #tpu.memory_space<vmem>>, %arg3: memref<8x10xf32, #tpu.memory_space<vmem>>, %arg4: memref<1x128xf32, #tpu.memory_space<vmem>>) attributes {dimension_semantics = [#tpu.dimension_semantics<parallel>], iteration_bounds = array<i64: 2>, scalar_prefetch = 0 : i64, scratch_operands = 0 : i64, tpu.core_type = #tpu.core_type<tc>, window_params = [{transform_indices = @transform_0, window_bounds = array<i64: 4, 128>}, {transform_indices = @transform_1, window_bounds = array<i64: 1, 128>}, {pipeline_mode = #tpu.pipeline_mode<synchronous>, transform_indices = @transform_2, window_bounds = array<i64: 8, 10>}, {transform_indices = @transform_3, window_bounds = array<i64: 1, 128>}]} {
    %c0 = arith.constant 0 : index
    %c7 = arith.constant 7 : index
    %0 = vector.load %arg3[%c0, %c7] : memref<8x10xf32, #tpu.memory_space<vmem>>, vector<8x1xf32>
    %c0_0 = arith.constant 0 : index
    %c8 = arith.constant 8 : index
    %1 = vector.load %arg3[%c0_0, %c8] : memref<8x10xf32, #tpu.memory_space<vmem>>, vector<8x1xf32>
    %c0_1 = arith.constant 0 : index
    %c9 = arith.constant 9 : index
    %2 = vector.load %arg3[%c0_1, %c9] : memref<8x10xf32, #tpu.memory_space<vmem>>, vector<1x1xf32>
    %3 = vector.shape_cast %0 : vector<8x1xf32> to vector<8x1xf32>
    %4 = vector.broadcast %3 : vector<8x1xf32> to vector<8x128xf32>
    %c0_2 = arith.constant 0 : index
    %c0_3 = arith.constant 0 : index
    %5 = vector.load %arg3[%c0_2, %c0_3] : memref<8x10xf32, #tpu.memory_space<vmem>>, vector<8x1xf32>
    %c0_4 = arith.constant 0 : index
    %c0_5 = arith.constant 0 : index
    %6 = vector.load %arg1[%c0_4, %c0_5] : memref<4x128xf32, #tpu.memory_space<vmem>>, vector<1x128xf32>
    %7 = vector.broadcast %5 : vector<8x1xf32> to vector<8x128xf32>
    %8 = vector.broadcast %6 : vector<1x128xf32> to vector<8x128xf32>
    %9 = arith.mulf %7, %8 : vector<8x128xf32>
    %10 = arith.addf %4, %9 : vector<8x128xf32>
    %c0_6 = arith.constant 0 : index
    %c1 = arith.constant 1 : index
    %11 = vector.load %arg3[%c0_6, %c1] : memref<8x10xf32, #tpu.memory_space<vmem>>, vector<8x1xf32>
    %c1_7 = arith.constant 1 : index
    %c0_8 = arith.constant 0 : index
    %12 = vector.load %arg1[%c1_7, %c0_8] : memref<4x128xf32, #tpu.memory_space<vmem>>, vector<1x128xf32>
    %13 = vector.broadcast %11 : vector<8x1xf32> to vector<8x128xf32>
    %14 = vector.broadcast %12 : vector<1x128xf32> to vector<8x128xf32>
    %15 = arith.mulf %13, %14 : vector<8x128xf32>
    %16 = arith.addf %10, %15 : vector<8x128xf32>
    %c0_9 = arith.constant 0 : index
    %c2 = arith.constant 2 : index
    %17 = vector.load %arg3[%c0_9, %c2] : memref<8x10xf32, #tpu.memory_space<vmem>>, vector<8x1xf32>
    %c2_10 = arith.constant 2 : index
    %c0_11 = arith.constant 0 : index
    %18 = vector.load %arg1[%c2_10, %c0_11] : memref<4x128xf32, #tpu.memory_space<vmem>>, vector<1x128xf32>
    %19 = vector.broadcast %17 : vector<8x1xf32> to vector<8x128xf32>
    %20 = vector.broadcast %18 : vector<1x128xf32> to vector<8x128xf32>
    %21 = arith.mulf %19, %20 : vector<8x128xf32>
    %22 = arith.addf %16, %21 : vector<8x128xf32>
    %c0_12 = arith.constant 0 : index
    %c3 = arith.constant 3 : index
    %23 = vector.load %arg3[%c0_12, %c3] : memref<8x10xf32, #tpu.memory_space<vmem>>, vector<8x1xf32>
    %c3_13 = arith.constant 3 : index
    %c0_14 = arith.constant 0 : index
    %24 = vector.load %arg1[%c3_13, %c0_14] : memref<4x128xf32, #tpu.memory_space<vmem>>, vector<1x128xf32>
    %25 = vector.broadcast %23 : vector<8x1xf32> to vector<8x128xf32>
    %26 = vector.broadcast %24 : vector<1x128xf32> to vector<8x128xf32>
    %27 = arith.mulf %25, %26 : vector<8x128xf32>
    %28 = arith.addf %22, %27 : vector<8x128xf32>
    %c0_15 = arith.constant 0 : index
    %c0_16 = arith.constant 0 : index
    %29 = vector.load %arg2[%c0_15, %c0_16] : memref<1x128xi32, #tpu.memory_space<vmem>>, vector<1x128xi32>
    %c0_i32 = arith.constant 0 : i32
    %30 = vector.broadcast %c0_i32 : i32 to vector<1x128xi32>
    %31 = arith.cmpi eq, %29, %30 : vector<1x128xi32>
    %32 = arith.extui %31 : vector<1x128xi1> to vector<1x128xi32>
    %33 = arith.sitofp %32 : vector<1x128xi32> to vector<1x128xf32>
    %c0_17 = arith.constant 0 : index
    %c4 = arith.constant 4 : index
    %34 = vector.load %arg3[%c0_17, %c4] : memref<8x10xf32, #tpu.memory_space<vmem>>, vector<8x1xf32>
    %35 = vector.broadcast %34 : vector<8x1xf32> to vector<8x128xf32>
    %36 = vector.broadcast %33 : vector<1x128xf32> to vector<8x128xf32>
    %37 = arith.mulf %35, %36 : vector<8x128xf32>
    %38 = arith.addf %28, %37 : vector<8x128xf32>
    %c1_i32 = arith.constant 1 : i32
    %39 = vector.broadcast %c1_i32 : i32 to vector<1x128xi32>
    %40 = arith.cmpi eq, %29, %39 : vector<1x128xi32>
    %41 = arith.extui %40 : vector<1x128xi1> to vector<1x128xi32>
    %42 = arith.sitofp %41 : vector<1x128xi32> to vector<1x128xf32>
    %c0_18 = arith.constant 0 : index
    %c5 = arith.constant 5 : index
    %43 = vector.load %arg3[%c0_18, %c5] : memref<8x10xf32, #tpu.memory_space<vmem>>, vector<8x1xf32>
    %44 = vector.broadcast %43 : vector<8x1xf32> to vector<8x128xf32>
    %45 = vector.broadcast %42 : vector<1x128xf32> to vector<8x128xf32>
    %46 = arith.mulf %44, %45 : vector<8x128xf32>
    %47 = arith.addf %38, %46 : vector<8x128xf32>
    %c2_i32 = arith.constant 2 : i32
    %48 = vector.broadcast %c2_i32 : i32 to vector<1x128xi32>
    %49 = arith.cmpi eq, %29, %48 : vector<1x128xi32>
    %50 = arith.extui %49 : vector<1x128xi1> to vector<1x128xi32>
    %51 = arith.sitofp %50 : vector<1x128xi32> to vector<1x128xf32>
    %c0_19 = arith.constant 0 : index
    %c6 = arith.constant 6 : index
    %52 = vector.load %arg3[%c0_19, %c6] : memref<8x10xf32, #tpu.memory_space<vmem>>, vector<8x1xf32>
    %53 = vector.broadcast %52 : vector<8x1xf32> to vector<8x128xf32>
    %54 = vector.broadcast %51 : vector<1x128xf32> to vector<8x128xf32>
    %55 = arith.mulf %53, %54 : vector<8x128xf32>
    %56 = arith.addf %47, %55 : vector<8x128xf32>
    %57 = math.tanh %56 : vector<8x128xf32>
    %58 = vector.broadcast %1 : vector<8x1xf32> to vector<8x128xf32>
    %59 = arith.mulf %57, %58 : vector<8x128xf32>
    %cst = arith.constant dense<0.000000e+00> : vector<128xf32>
    %60 = vector.multi_reduction <add>, %59, %cst [0] : vector<8x128xf32> to vector<128xf32>
    %61 = vector.shape_cast %60 : vector<128xf32> to vector<1x128xf32>
    %62 = vector.broadcast %2 : vector<1x1xf32> to vector<1x128xf32>
    %63 = arith.addf %61, %62 : vector<1x128xf32>
    %c0_20 = arith.constant 0 : index
    %c0_21 = arith.constant 0 : index
    %64 = vector.load %arg4[%c0_20, %c0_21] : memref<1x128xf32, #tpu.memory_space<vmem>>, vector<1x128xf32>
    tpu.vector_store %arg4[%c0_20, %c0_21], %63 {strides = array<i32>} : memref<1x128xf32, #tpu.memory_space<vmem>>, vector<1x128xf32>,
    return
  }
  func.func @transform_0(%arg0: i32) -> (i32, i32) {
    %c0_i32 = arith.constant 0 : i32
    %c0_i32_0 = arith.constant 0 : i32
    return %c0_i32, %arg0 : i32, i32
  }
  func.func @transform_1(%arg0: i32) -> (i32, i32) {
    %c0_i32 = arith.constant 0 : i32
    %c0_i32_0 = arith.constant 0 : i32
    return %c0_i32, %arg0 : i32, i32
  }
  func.func @transform_2(%arg0: i32) -> (i32, i32) {
    %c0_i32 = arith.constant 0 : i32
    %c0_i32_0 = arith.constant 0 : i32
    %c0_i32_1 = arith.constant 0 : i32
    return %c0_i32, %c0_i32_0 : i32, i32
  }
  func.func @transform_3(%arg0: i32) -> (i32, i32) {
    %c0_i32 = arith.constant 0 : i32
    %c0_i32_0 = arith.constant 0 : i32
    return %c0_i32, %arg0 : i32, i32
  }
}

</mosaic_0001>

<llo_original>
// kernel: tpu_custom_call.1
$region0: #{tpu_custom_call.1}
  #allocation0 [shape = 'u32[]', space=smem, size = 0x4, offset = 0x4, fixed_abs, tag = 'smem constant byte address 0x4 - core index']
  #allocation1 [shape = 'u32[72,128]{1,0:T(1,128)}', space=vmem, size = 0x9000, scoped, tag = 'internal scratch']
  %s0 = inlined_call_operand.hbm [shape: f32[4,256], index: 0, kind: input, shape index: {}]
  %s1 = inlined_call_operand.hbm [shape: s32[1,256], index: 1, kind: input, shape index: {}]
  %s2 = inlined_call_operand.hbm [shape: f32[8,10], index: 2, kind: input, shape index: {}]
  %s3 = inlined_call_operand.hbm [shape: f32[1,256], index: 3, kind: output, shape index: {}]
  %s4 = sld [smem:[#allocation0]]
  $region57: #{tpu_custom_call.1} parent=0
    _
  %s6 = ssub.s32 1, %s4
  %s7 = scalar_select 0, %s6, %s4
  $region1: #{tpu_custom_call.1} parent=0
    #allocation2 [shape = 'u8[4096]{0}', space=vmem, size = 0x1000, scoped, tag = 'input window, operand 0']
    #allocation3 [shape = 's32[2]{0}', space=sflag, size = 0x8, scoped, tag = 'scoped memory for tpu_custom_call.1']
    #allocation4 [shape = 's32[2]{0}', space=sflag, size = 0x8, scoped, tag = 'scoped memory for tpu_custom_call.1']
    #allocation5 [shape = 'u8[1024]{0}', space=vmem, size = 0x400, scoped, tag = 'input window, operand 1']
    #allocation6 [shape = 's32[2]{0}', space=sflag, size = 0x8, scoped, tag = 'scoped memory for tpu_custom_call.1']
    #allocation7 [shape = 'u8[4096]{0}', space=vmem, size = 0x1000, scoped, tag = 'input window, operand 2, single buffered']
    #allocation8 [shape = 'u8[1024]{0}', space=vmem, size = 0x400, scoped, tag = 'output window, operand 0']
    %8 = vsyncpa [#allocation3], 0
    %s9 = scalar_lea.sflag [#allocation3], 1
    %10 = vsyncpa %s9, 0
    %11 = vsyncpa [#allocation6], 0
    %s12 = scalar_lea.sflag [#allocation6], 1
    %13 = vsyncpa %s12, 0
    %14 = vsyncpa [#allocation4], 0
    %s15 = scalar_lea.sflag [#allocation4], 1
    %16 = vsyncpa %s15, 0
    loop: start=0, step=1, limit=4
    $region2: #{tpu_custom_call.1} parent=1 // loop_pre_header
      _
    $region3: #{tpu_custom_call.1} parent=1 // loop_header
      %s18 = sphi 0, %s22
      %p19 = scmp.ge.s32.totalorder %s18, 4
      %s28 = sphi 0, %s30
      %s31 = sphi 0, %s28
      %s32 = sphi 0, %s31
      %s48 = sphi 0, %s32
      %s54 = sphi 0, %s56
      %s57 = sphi 0, %s54
      %s58 = sphi 0, %s57
      %s74 = sphi 0, %s58
      %s78 = sphi 0, %s78
      %s80 = sphi 0, %s78
      %s81 = sphi 0, %s80
      %s95 = sphi 0, %s81
      %s101 = sphi 0, %s103
      %s104 = sphi 0, %s101
      %s105 = sphi 0, %s104
      %s121 = sphi 0, %s105
    $region4: #{tpu_custom_call.1} parent=1 // loop_header_branch
      %21 = sbr.rel (%p19) target = $region8
    $region5: #{tpu_custom_call.1} parent=1 // loop_body
      %s23 = ssub.s32 %s18, 1
      %s24 = ssub.s32 %s18, 2
      %s25 = sadd.s32 %s18, 1
      %s26 = ssub.s32 %s18, %s25
      %p27 = scmp.eq.s32.totalorder %s26, 0
      %s29 = sadd.s32 %s28, 1
      %s30 = scalar_select %p27, %s28, %s29
      %p33 = pneg %p27
      %p34 = scmp.eq.s32.totalorder %s18, 1
      %p35 = por %p33, %p34
      %p36 = scmp.ne.s32.totalorder %s28, %s31
      %p37 = scmp.eq.s32.totalorder %s18, 0
      %p38 = por %p36, %p37
      %p39 = scmp.ne.s32.totalorder %s28, %s31
      %p40 = scmp.eq.s32.totalorder %s23, 1
      %p41 = por %p39, %p40
      %p42 = scmp.ne.s32.totalorder %s31, %s32
      %p43 = scmp.eq.s32.totalorder %s23, 0
      %p44 = por %p42, %p43
      %p45 = scmp.ne.s32.totalorder %s31, %s32
      %p46 = scmp.eq.s32.totalorder %s24, 1
      %p47 = por %p45, %p46
      %p49 = scmp.ne.s32.totalorder %s32, %s48
      %p50 = scmp.eq.s32.totalorder %s24, 0
      %p51 = por %p49, %p50
      %s52 = ssub.s32 %s18, %s25
      %p53 = scmp.eq.s32.totalorder %s52, 0
      %s55 = sadd.s32 %s54, 1
      %s56 = scalar_select %p53, %s54, %s55
      %p59 = pneg %p53
      %p60 = scmp.eq.s32.totalorder %s18, 1
      %p61 = por %p59, %p60
      %p62 = scmp.ne.s32.totalorder %s54, %s57
      %p63 = scmp.eq.s32.totalorder %s18, 0
      %p64 = por %p62, %p63
      %p65 = scmp.ne.s32.totalorder %s54, %s57
      %p66 = scmp.eq.s32.totalorder %s23, 1
      %p67 = por %p65, %p66
      %p68 = scmp.ne.s32.totalorder %s57, %s58
      %p69 = scmp.eq.s32.totalorder %s23, 0
      %p70 = por %p68, %p69
      %p71 = scmp.ne.s32.totalorder %s57, %s58
      %p72 = scmp.eq.s32.totalorder %s24, 1
      %p73 = por %p71, %p72
      %p75 = scmp.ne.s32.totalorder %s58, %s74
      %p76 = scmp.eq.s32.totalorder %s24, 0
      %p77 = por %p75, %p76
      %s79 = sadd.s32 %s78, 1
      %p82 = scmp.eq.s32.totalorder %s18, 1
      %p83 = scmp.ne.s32.totalorder %s78, %s80
      %p84 = scmp.eq.s32.totalorder %s18, 0
      %p85 = por %p83, %p84
      %p86 = scmp.ne.s32.totalorder %s78, %s80
      %p87 = scmp.eq.s32.totalorder %s23, 1
      %p88 = por %p86, %p87
      %p89 = scmp.ne.s32.totalorder %s80, %s81
      %p90 = scmp.eq.s32.totalorder %s23, 0
      %p91 = por %p89, %p90
      %p92 = scmp.ne.s32.totalorder %s80, %s81
      %p93 = scmp.eq.s32.totalorder %s24, 1
      %p94 = por %p92, %p93
      %p96 = scmp.ne.s32.totalorder %s81, %s95
      %p97 = scmp.eq.s32.totalorder %s24, 0
      %p98 = por %p96, %p97
      %s99 = ssub.s32 %s18, %s25
      %p100 = scmp.eq.s32.totalorder %s99, 0
      %s102 = sadd.s32 %s101, 1
      %s103 = scalar_select %p100, %s101, %s102
      %p106 = pneg %p100
      %p107 = scmp.eq.s32.totalorder %s18, 1
      %p108 = por %p106, %p107
      %p109 = scmp.ne.s32.totalorder %s101, %s104
      %p110 = scmp.eq.s32.totalorder %s18, 0
      %p111 = por %p109, %p110
      %p112 = scmp.ne.s32.totalorder %s101, %s104
      %p113 = scmp.eq.s32.totalorder %s23, 1
      %p114 = por %p112, %p113
      %p115 = scmp.ne.s32.totalorder %s104, %s105
      %p116 = scmp.eq.s32.totalorder %s23, 0
      %p117 = por %p115, %p116
      %p118 = scmp.ne.s32.totalorder %s104, %s105
      %p119 = scmp.eq.s32.totalorder %s24, 1
      %p120 = por %p118, %p119
      %p122 = scmp.ne.s32.totalorder %s105, %s121
      %p123 = scmp.eq.s32.totalorder %s24, 0
      %p124 = por %p122, %p123
      %p125 = scmp.le.s32.totalorder 1, %s18
      %p126 = scmp.lt.s32.totalorder %s18, 3
      %p127 = pnand %p125, %p126
      %p128 = pneg %p127
      // Predicated region
      $region9: #{tpu_custom_call.1} parent=5 // pred_check
        _
      $region10: #{tpu_custom_call.1} parent=5 // pred_check_branch
        %130 = sbr.rel (%p127) target = $region12
      $region11: #{tpu_custom_call.1} parent=5 // pred_region
        %s131 = ssub.s32 %s18, 1
        // Predicated region
        $region13: #{tpu_custom_call.1} parent=11 // pred_check
          %p132 = pneg %p91
        $region14: #{tpu_custom_call.1} parent=11 // pred_check_branch
          %134 = sbr.rel (%p132) target = $region16
        $region15: #{tpu_custom_call.1} parent=11 // pred_region
          %136 = vsyncadd [#allocation6], 0
          %s138 = sshll.u32 %s2, 4
          %s139 = int_to_ptr.hbm [resolvable:$true] %s138
          %s140 = sshll.u32 [#allocation7], 4
          %s141 = int_to_ptr.vmem [resolvable:$true] %s140
          %143 = dma.hbm_to_vmem [thread:$0]  %s139, 128, %s141, [#allocation6]
        $region16: #{tpu_custom_call.1} parent=11 // pred_fallthru
          _
      $region12: #{tpu_custom_call.1} parent=5 // pred_fallthru
        _
      %p144 = scmp.lt.s32.totalorder %s18, 2
      // Predicated region
      $region17: #{tpu_custom_call.1} parent=5 // pred_check
        %p145 = pneg %p144
      $region18: #{tpu_custom_call.1} parent=5 // pred_check_branch
        %147 = sbr.rel (%p145) target = $region20
      $region19: #{tpu_custom_call.1} parent=5 // pred_region
        // Predicated region
        $region21: #{tpu_custom_call.1} parent=19 // pred_check
          %p148 = pneg %p38
        $region22: #{tpu_custom_call.1} parent=19 // pred_check_branch
          %150 = sbr.rel (%p148) target = $region24
        $region23: #{tpu_custom_call.1} parent=19 // pred_region
          %s151 = sand.u32 %s28, 1
          %s152 = scalar_lea.sflag [#allocation3], %s151
          %s153 = sand.u32 %s28, 1
          %s154 = smul.addr %s153, 4
          %s155 = scalar_lea.vmem [#allocation2], %s154
          %157 = vsyncadd %s152, 0
          %s158 = smul.addr %s18, 4
          %s159 = scalar_lea.hbm %s0, %s158
          %s161 = sshll.u32 %s159, 4
          %s162 = int_to_ptr.hbm [resolvable:$true] %s161
          %s163 = sshll.u32 %s155, 4
          %s164 = int_to_ptr.vmem [resolvable:$true] %s163
          %166 = dma.hbm_to_vmem [thread:$0]  %s162, 64, %s164, %s152
        $region24: #{tpu_custom_call.1} parent=19 // pred_fallthru
          _
        // Predicated region
        $region25: #{tpu_custom_call.1} parent=19 // pred_check
          %p167 = pneg %p64
        $region26: #{tpu_custom_call.1} parent=19 // pred_check_branch
          %169 = sbr.rel (%p167) target = $region28
        $region27: #{tpu_custom_call.1} parent=19 // pred_region
          %s170 = sand.u32 %s18, 1
          %s171 = scalar_lea.sflag [#allocation6], %s170
          %s172 = sand.u32 %s54, 1
          %s173 = scalar_lea.vmem [#allocation5], %s172
          %175 = vsyncadd %s171, 0
          %s176 = scalar_lea.hbm %s1, %s18
          %s178 = sshll.u32 %s176, 4
          %s179 = int_to_ptr.hbm [resolvable:$true] %s178
          %s180 = sshll.u32 %s173, 4
          %s181 = int_to_ptr.vmem [resolvable:$true] %s180
          %183 = dma.hbm_to_vmem [thread:$0]  %s179, 16, %s181, %s171
        $region28: #{tpu_custom_call.1} parent=19 // pred_fallthru
          _
      $region20: #{tpu_custom_call.1} parent=5 // pred_fallthru
        _
      %p184 = scmp.le.s32.totalorder 1, %s18
      %p185 = scmp.lt.s32.totalorder %s18, 3
      %p186 = pnand %p184, %p185
      %p187 = pneg %p186
      // Predicated region
      $region29: #{tpu_custom_call.1} parent=5 // pred_check
        _
      $region30: #{tpu_custom_call.1} parent=5 // pred_check_branch
        %189 = sbr.rel (%p186) target = $region32
      $region31: #{tpu_custom_call.1} parent=5 // pred_region
        %s190 = ssub.s32 %s18, 1
        %s191 = sand.u32 %s31, 1
        %s192 = scalar_lea.sflag [#allocation3], %s191
        %s193 = sand.u32 %s31, 1
        %s194 = smul.addr %s193, 4
        %s195 = scalar_lea.vmem [#allocation2], %s194
        // Predicated region
        $region33: #{tpu_custom_call.1} parent=31 // pred_check
          %p196 = pneg %p44
        $region34: #{tpu_custom_call.1} parent=31 // pred_check_branch
          %198 = sbr.rel (%p196) target = $region36
        $region35: #{tpu_custom_call.1} parent=31 // pred_region
          %200 = dma.done %s192, 64
        $region36: #{tpu_custom_call.1} parent=31 // pred_fallthru
          _
        %s201 = sand.u32 %s23, 1
        %s202 = scalar_lea.sflag [#allocation6], %s201
        %s203 = sand.u32 %s57, 1
        %s204 = scalar_lea.vmem [#allocation5], %s203
        // Predicated region
        $region37: #{tpu_custom_call.1} parent=31 // pred_check
          %p205 = pneg %p70
        $region38: #{tpu_custom_call.1} parent=31 // pred_check_branch
          %207 = sbr.rel (%p205) target = $region40
        $region39: #{tpu_custom_call.1} parent=31 // pred_region
          %209 = dma.done %s202, 16
        $region40: #{tpu_custom_call.1} parent=31 // pred_fallthru
          _
        // Predicated region
        $region41: #{tpu_custom_call.1} parent=31 // pred_check
          %p210 = pneg %p91
        $region42: #{tpu_custom_call.1} parent=31 // pred_check_branch
          %212 = sbr.rel (%p210) target = $region44
        $region43: #{tpu_custom_call.1} parent=31 // pred_region
          %214 = dma.done [#allocation6], 128
        $region44: #{tpu_custom_call.1} parent=31 // pred_fallthru
          _
        %s215 = sand.u32 %s31, 1
        %s216 = scalar_lea.sflag [#allocation3], %s215
        %s217 = sand.u32 %s31, 1
        %s218 = smul.addr %s217, 4
        %s219 = scalar_lea.vmem [#allocation2], %s218
        %p220 = pneg %p44
        %p221 = pneg %p41
        %s222 = sand.u32 %s23, 1
        %s223 = scalar_lea.sflag [#allocation6], %s222
        %s224 = sand.u32 %s57, 1
        %s225 = scalar_lea.vmem [#allocation5], %s224
        %p226 = pneg %p70
        %p227 = pneg %p67
        %p228 = pneg %p91
        %p229 = pneg %p88
        %p230 = pneg %p117
        %p231 = pneg %p114
        %s232 = sand.u32 %s104, 1
        %s233 = scalar_lea.sflag [#allocation4], %s232
        %s234 = sand.u32 %s104, 1
        %s235 = scalar_lea.vmem [#allocation8], %s234
        %v236 = vld [vmem:[#allocation7] sm:$0xff]
        %v237 = vld [vmem:[#allocation7] sm:$0x1]
        %239 = vset.pattern.permute.xlu0 7
        %240 = vperm.xlu0 %239, %v236
        %v241 = vpop.permute.xlu0 %240
        %v243 = vld [vmem:[%s195] sm:$0x1]
        %244 = vset.pattern.permute.xlu0 0
        %245 = vperm.xlu0 %244, %v236
        %v246 = vpop.permute.xlu0 %245
        %v248 = vperm.slane %v243, 0
        %v249 = vmul.f32 %v246, %v248
        %v250 = vadd.f32 %v241, %v249
        %v251 = vld [vmem:[%s195 + $0x1] sm:$0x1]
        %252 = vset.pattern.permute.xlu0 1
        %253 = vperm.xlu0 %252, %v236
        %v254 = vpop.permute.xlu0 %253
        %v256 = vperm.slane %v251, 0
        %v257 = vmul.f32 %v254, %v256
        %v258 = vadd.f32 %v250, %v257
        %v259 = vld [vmem:[%s195 + $0x2] sm:$0x1]
        %260 = vset.pattern.permute.xlu0 2
        %261 = vperm.xlu0 %260, %v236
        %v262 = vpop.permute.xlu0 %261
        %v264 = vperm.slane %v259, 0
        %v265 = vmul.f32 %v262, %v264
        %v266 = vadd.f32 %v258, %v265
        %v267 = vld [vmem:[%s195 + $0x3] sm:$0x1]
        %268 = vset.pattern.permute.xlu0 3
        %269 = vperm.xlu0 %268, %v236
        %v270 = vpop.permute.xlu0 %269
        %v272 = vperm.slane %v267, 0
        %v273 = vmul.f32 %v270, %v272
        %v274 = vadd.f32 %v266, %v273
        %v275 = vld [vmem:[%s204] sm:$0x1]
        %vm276 = vcmp.eq.s32.totalorder %v275, 0
        %v277 = vsel %vm276, 1, 0
        %v278 = vcvt.s32.f32 %v277
        %279 = vset.pattern.permute.xlu0 4
        %280 = vperm.xlu0 %279, %v236
        %v281 = vpop.permute.xlu0 %280
        %v284 = vperm.slane %v278, 0
        %v286 = vmul.f32 %v281, %v284
        %v287 = vadd.f32 %v274, %v286
        %vm288 = vcmp.eq.s32.totalorder %v275, 1
        %v289 = vsel %vm288, 1, 0
        %v290 = vcvt.s32.f32 %v289
        %291 = vset.pattern.permute.xlu0 5
        %292 = vperm.xlu0 %291, %v236
        %v293 = vpop.permute.xlu0 %292
        %v296 = vperm.slane %v290, 0
        %v298 = vmul.f32 %v293, %v296
        %v299 = vadd.f32 %v287, %v298
        %vm300 = vcmp.eq.s32.totalorder %v275, 2
        %v301 = vsel %vm300, 1, 0
        %v302 = vcvt.s32.f32 %v301
        %303 = vset.pattern.permute.xlu0 6
        %304 = vperm.xlu0 %303, %v236
        %v305 = vpop.permute.xlu0 %304
        %v308 = vperm.slane %v302, 0
        %v310 = vmul.f32 %v305, %v308
        %v311 = vadd.f32 %v299, %v310
        %v312 = vtanh.pop %v311
        %313 = vset.pattern.permute.xlu0 8
        %314 = vperm.xlu0 %313, %v236
        %v315 = vpop.permute.xlu0 %314
        %v317 = vmul.f32 %v312, %v315
        %v318 = vrot.slane %v317, 4
        %v319 = vadd.f32 %v317, %v318
        %v320 = vrot.slane %v319, 2
        %v321 = vadd.f32 %v319, %v320
        %v322 = vrot.slane %v321, 1
        %v323 = vadd.f32 %v321, %v322
        %325 = vset.pattern.permute.xlu0 9
        %326 = vperm.xlu0 %325, %v237
        %v327 = vpop.permute.xlu0 %326
        %v329 = vadd.f32 %v323, %v327
        %330 = vst [vmem:[%s235] sm:$0x1] %v329
        %s331 = sand.u32 %s104, 1
        %s332 = scalar_lea.sflag [#allocation4], %s331
        %s333 = sand.u32 %s104, 1
        %s334 = scalar_lea.vmem [#allocation8], %s333
        // Predicated region
        $region45: #{tpu_custom_call.1} parent=31 // pred_check
          %p335 = pneg %p114
        $region46: #{tpu_custom_call.1} parent=31 // pred_check_branch
          %337 = sbr.rel (%p335) target = $region48
        $region47: #{tpu_custom_call.1} parent=31 // pred_region
          %339 = vsyncadd %s332, 0
          %s340 = scalar_lea.hbm %s3, %s23
          %s342 = sshll.u32 %s334, 4
          %s343 = int_to_ptr.vmem [resolvable:$true] %s342
          %s344 = sshll.u32 %s340, 4
          %s345 = int_to_ptr.hbm [resolvable:$true] %s344
          %347 = dma.vmem_to_hbm [thread:$0]  %s343, 16, %s345, %s332
        $region48: #{tpu_custom_call.1} parent=31 // pred_fallthru
          _
      $region32: #{tpu_custom_call.1} parent=5 // pred_fallthru
        _
      %p348 = scmp.le.s32.totalorder 2, %s18
      // Predicated region
      $region49: #{tpu_custom_call.1} parent=5 // pred_check
        %p349 = pneg %p348
      $region50: #{tpu_custom_call.1} parent=5 // pred_check_branch
        %351 = sbr.rel (%p349) target = $region52
      $region51: #{tpu_custom_call.1} parent=5 // pred_region
        %s352 = ssub.s32 %s18, 2
        // Predicated region
        $region53: #{tpu_custom_call.1} parent=51 // pred_check
          %p353 = pneg %p120
        $region54: #{tpu_custom_call.1} parent=51 // pred_check_branch
          %355 = sbr.rel (%p353) target = $region56
        $region55: #{tpu_custom_call.1} parent=51 // pred_region
          %s356 = sand.u32 %s105, 1
          %s357 = scalar_lea.sflag [#allocation4], %s356
          %s358 = sand.u32 %s105, 1
          %s359 = scalar_lea.vmem [#allocation8], %s358
          %361 = dma.done %s357, 16
        $region56: #{tpu_custom_call.1} parent=51 // pred_fallthru
          _
      $region52: #{tpu_custom_call.1} parent=5 // pred_fallthru
        _
    $region6: #{tpu_custom_call.1} parent=1 // loop_footer
      %s22 = sadd.s32 1, %s18
    $region7: #{tpu_custom_call.1} parent=1 // loop_footer_branch
      %17 = sbr.rel target = $region3
    $region8: #{tpu_custom_call.1} parent=1 // loop_exit
      _
    %362 = vsyncpa [#allocation3], 1
    %s363 = scalar_lea.sflag [#allocation3], 1
    %364 = vsyncpa %s363, 1
    %365 = vsyncpa [#allocation6], 1
    %s366 = scalar_lea.sflag [#allocation6], 1
    %367 = vsyncpa %s366, 1
    %368 = vsyncpa [#allocation4], 1
    %s369 = scalar_lea.sflag [#allocation4], 1
    %370 = vsyncpa %s369, 1

</llo_original>
